<compile_context>
chip_gen: v6e
topology: v6e:2x2x1
jax: 0.10.0
libtpu: 0.0.40
codegen_flags: <defaults>
</compile_context>

<pallas_src>
import math

import jax
import jax.numpy as jnp
from jax.experimental import pallas as pl
from jax.experimental.pallas import tpu as pltpu

_LANE = 128


def _round_up(n: int, m: int) -> int:
    return ((n + m - 1) // m) * m


def _pad2d(a, rows, cols):
    return jnp.pad(a, ((0, rows - a.shape[0]), (0, cols - a.shape[1])))


def _gelu_exact(x):
    # PyTorch nn.GELU() default is the exact erf formulation (kept for parity).
    return 0.5 * x * (1.0 + jax.lax.erf(x * (1.0 / math.sqrt(2.0))))


def _vmem_capacity_bytes() -> int:
    """Physical VMEM per core; conservative v7x fallback if the query fails."""
    try:
        cap = int(pltpu.get_tpu_info().vmem_capacity_bytes)
        if cap > 0:
            return cap
    except Exception:
        pass
    return 64 * 1024 * 1024


def _mlp_kernel(x_ref, w1_ref, b1_ref, w2_ref, b2_ref, w3_ref, b3_ref, o_ref):
    # In-kernel cast of the x tile (f32 HBM stream -> bf16 MXU operand).
    x = x_ref[...].astype(w1_ref.dtype)

    # ---- layers: Linear -> GELU ----  (f32 accumulation on the MXU)
    h = jnp.dot(x, w1_ref[...], preferred_element_type=jnp.float32)
    h = _gelu_exact(h + b1_ref[...])                 # f32 epilogue

    # ---- layers: Linear ----
    h = jnp.dot(h.astype(w2_ref.dtype), w2_ref[...],
                preferred_element_type=jnp.float32)
    h = h + b2_ref[...]

    # ---- head: GELU -> Linear ----
    h = _gelu_exact(h)
    y = jnp.dot(h.astype(w3_ref.dtype), w3_ref[...],
                preferred_element_type=jnp.float32)
    o_ref[...] = (y + b3_ref[...]).astype(o_ref.dtype)


def mlp_forward(x, params, *, compute_dtype=jnp.bfloat16, tile_b=4096):
    """x: [B, C, H, W] (or [B, D_in]).  params: dict of weights/biases."""
    B = x.shape[0]
    x2d = x.reshape(B, -1)                 # flatten(1) — glue, plain JAX
    d_in = x2d.shape[1]
    in_dtype = x2d.dtype                   # streamed natively; cast in-kernel

    w1, b1 = params["w1"], params["b1"]
    w2, b2 = params["w2"], params["b2"]
    w3, b3 = params["w3"], params["b3"]
    out_dim = w3.shape[1]

    # --- lane-pad all feature dims to multiples of 128 (zero-filled) ---
    d_in_p = _round_up(d_in, _LANE)
    h1_p = _round_up(w1.shape[1], _LANE)
    h2_p = _round_up(w2.shape[1], _LANE)
    out_p = _round_up(out_dim, _LANE)

    w1p = _pad2d(w1, d_in_p, h1_p).astype(compute_dtype)
    w2p = _pad2d(w2, h1_p, h2_p).astype(compute_dtype)
    w3p = _pad2d(w3, h2_p, out_p).astype(compute_dtype)
    b1p = _pad2d(b1, 1, h1_p).astype(jnp.float32)   # bias/GELU epilogue stays f32
    b2p = _pad2d(b2, 1, h2_p).astype(jnp.float32)
    b3p = _pad2d(b3, 1, out_p).astype(jnp.float32)

    # Padded output lanes are mostly dead weight: store in compute_dtype to
    # halve the writeback; the tiny [B, out_dim] slice is cast back afterwards.
    store_dtype = compute_dtype

    # --- generation-aware VMEM budget / limit ---
    cap = _vmem_capacity_bytes()
    vmem_budget = min(int(cap * 0.60), 96 * 1024 * 1024)       # ~38 MiB on v7x, ~77 MiB on v5e/v6e
    vmem_limit = min(int(cap * 0.75), 112 * 1024 * 1024)       # above default scoped limits

    in_bytes = jnp.dtype(in_dtype).itemsize
    w_bytes_ = jnp.dtype(compute_dtype).itemsize
    out_bytes = jnp.dtype(store_dtype).itemsize

    # Resident (double-buffered by the pipeline, constant index_map) operands.
    const_bytes = 2 * ((w1p.size + w2p.size + w3p.size) * w_bytes_
                       + (b1p.size + b2p.size + b3p.size) * 4)
    # Per-row bytes: double-buffered x/out tiles + f32 intermediates (incl. a
    # factor for MXU accumulate copies), plus a flat compiler-scratch margin.
    per_row = (2 * (d_in_p * in_bytes + out_p * out_bytes)
               + 2 * (h1_p + h2_p + out_p) * 4)

    def _vmem_need(t):
        return const_bytes + t * per_row + (2 << 20)

    # bf16 blocks pack (16,128) vregs -> align the row tile to 16 in that case.
    sub = 8 if (in_bytes == 4 and out_bytes == 4) else 16
    tb = _round_up(min(tile_b, _round_up(B, sub)), sub)
    while tb > sub and _vmem_need(tb) > vmem_budget:
        tb = _round_up(tb // 2, sub)

    b_pad = _round_up(B, tb)
    if b_pad != B or d_in_p != d_in:
        # Only materialize a padded copy when genuinely required (for d_in=1024
        # and B % tb == 0 this is a no-op).  No dtype cast here — done in-kernel.
        x2d = jnp.pad(x2d, ((0, b_pad - B), (0, d_in_p - d_in)))

    grid = (b_pad // tb,)

    cost = pl.CostEstimate(
        flops=2 * b_pad * (d_in_p * h1_p + h1_p * h2_p + h2_p * out_p),
        transcendentals=b_pad * (h1_p + h2_p),
        bytes_accessed=(b_pad * d_in_p * in_bytes
                        + (w1p.size + w2p.size + w3p.size) * w_bytes_
                        + (b1p.size + b2p.size + b3p.size) * 4
                        + b_pad * out_p * out_bytes),
    )

    out_padded = pl.pallas_call(
        _mlp_kernel,
        out_shape=jax.ShapeDtypeStruct((b_pad, out_p), store_dtype),
        grid=grid,
        in_specs=[
            pl.BlockSpec((tb, d_in_p), lambda i: (i, 0)),     # x: tiled over rows
            pl.BlockSpec((d_in_p, h1_p), lambda i: (0, 0)),   # weights: VMEM-resident
            pl.BlockSpec((1, h1_p), lambda i: (0, 0)),
            pl.BlockSpec((h1_p, h2_p), lambda i: (0, 0)),
            pl.BlockSpec((1, h2_p), lambda i: (0, 0)),
            pl.BlockSpec((h2_p, out_p), lambda i: (0, 0)),
            pl.BlockSpec((1, out_p), lambda i: (0, 0)),
        ],
        out_specs=pl.BlockSpec((tb, out_p), lambda i: (i, 0)),
        compiler_params=pltpu.CompilerParams(
            dimension_semantics=("parallel",),   # batch tiles shard across TCs
            vmem_limit_bytes=vmem_limit,
        ),
        cost_estimate=cost,
    )(x2d, w1p, b1p, w2p, b2p, w3p, b3p)

    return out_padded[:B, :out_dim].astype(in_dtype)


def init_params(key, input_dim, hidden_dim, output_dim):
    """Deterministic nn.Linear-style init (uniform(+/-1/sqrt(fan_in)))."""
    dims = [input_dim] + hidden_dim + [output_dim]
    names = ["1", "2", "3"]
    params = {}
    for name, fan_in, fan_out in zip(names, dims[:-1], dims[1:]):
        key, kw, kb = jax.random.split(key, 3)
        bound = 1.0 / math.sqrt(fan_in)
        params[f"w{name}"] = jax.random.uniform(
            kw, (fan_in, fan_out), jnp.float32, -bound, bound)
        params[f"b{name}"] = jax.random.uniform(
            kb, (1, fan_out), jnp.float32, -bound, bound)
    return params


def mlp_reference(x, params):
    """Pure-JAX reference of the same forward pass (for sanity checks)."""
    h = x.reshape(x.shape[0], -1)
    h = _gelu_exact(h @ params["w1"] + params["b1"])
    h = h @ params["w2"] + params["b2"]
    h = _gelu_exact(h)
    return h @ params["w3"] + params["b3"]


if __name__ == "__main__":
    # Small shapes: batch=2, channels=4, spatial=16x16  ->  input_dim=1024
    B, C, H, W = 2, 4, 16, 16
    input_dim = C * H * W
    hidden_dim = [32, 32]
    output_dim = 8

    key = jax.random.PRNGKey(0)
    key, kx = jax.random.split(key)
    x = jax.random.normal(kx, (B, C, H, W), jnp.float32)
    params = init_params(key, input_dim, hidden_dim, output_dim)

    ref = mlp_reference(x, params)

    # 1) f32 compute path: tight check of the kernel math vs the reference.
    out_f32 = jax.block_until_ready(
        mlp_forward(x, params, compute_dtype=jnp.float32))
    assert out_f32.shape == (B, output_dim)
    assert jnp.allclose(out_f32, ref, atol=1e-4, rtol=1e-4), "f32 mismatch vs reference"

    # 2) default bf16-streaming path (the perf configuration): looser tolerance
    #    since x/W are rounded to bf16 inside the kernel and the padded output
    #    is stored as bf16 before the final (tiny) slice back to f32.
    out_bf16 = jax.block_until_ready(mlp_forward(x, params))
    assert out_bf16.shape == (B, output_dim)
    assert jnp.allclose(out_bf16, ref, atol=3e-2, rtol=3e-2), "bf16 mismatch vs reference"

    print("KERNEL_OK")
</pallas_src>

<mosaic_0001>
module attributes {stable_mosaic.version = 11 : i64} {
  func.func @_mlp_kernel(%arg0: i32, %arg1: memref<8x1024xf32, #tpu.memory_space<vmem>>, %arg2: memref<1024x128xf32, #tpu.memory_space<vmem>>, %arg3: memref<1x128xf32, #tpu.memory_space<vmem>>, %arg4: memref<128x128xf32, #tpu.memory_space<vmem>>, %arg5: memref<1x128xf32, #tpu.memory_space<vmem>>, %arg6: memref<128x128xf32, #tpu.memory_space<vmem>>, %arg7: memref<1x128xf32, #tpu.memory_space<vmem>>, %arg8: memref<8x128xf32, #tpu.memory_space<vmem>>) attributes {dimension_semantics = [#tpu.dimension_semantics<parallel>], iteration_bounds = array<i64: 1>, scalar_prefetch = 0 : i64, scratch_operands = 0 : i64, tpu.core_type = #tpu.core_type<tc>, window_params = [{transform_indices = @transform_0, window_bounds = array<i64: 8, 1024>}, {pipeline_mode = #tpu.pipeline_mode<synchronous>, transform_indices = @transform_1, window_bounds = array<i64: 1024, 128>}, {pipeline_mode = #tpu.pipeline_mode<synchronous>, transform_indices = @transform_2, window_bounds = array<i64: 1, 128>}, {pipeline_mode = #tpu.pipeline_mode<synchronous>, transform_indices = @transform_3, window_bounds = array<i64: 128, 128>}, {pipeline_mode = #tpu.pipeline_mode<synchronous>, transform_indices = @transform_4, window_bounds = array<i64: 1, 128>}, {pipeline_mode = #tpu.pipeline_mode<synchronous>, transform_indices = @transform_5, window_bounds = array<i64: 128, 128>}, {pipeline_mode = #tpu.pipeline_mode<synchronous>, transform_indices = @transform_6, window_bounds = array<i64: 1, 128>}, {transform_indices = @transform_7, window_bounds = array<i64: 8, 128>}]} {
    %c0 = arith.constant 0 : index
    %c0_0 = arith.constant 0 : index
    %0 = vector.load %arg1[%c0, %c0_0] : memref<8x1024xf32, #tpu.memory_space<vmem>>, vector<8x1024xf32>
    %c0_1 = arith.constant 0 : index
    %c0_2 = arith.constant 0 : index
    %1 = vector.load %arg2[%c0_1, %c0_2] : memref<1024x128xf32, #tpu.memory_space<vmem>>, vector<1024x128xf32>
    %cst = arith.constant dense<0.000000e+00> : vector<8x128xf32>
    %2 = tpu.matmul %0, %1, %cst {dimension_numbers = #tpu.dot_dimension_numbers<[1], [0], [0], [1], [0, 0, 1, 1], [], []>} : vector<8x1024xf32>, vector<1024x128xf32>, vector<8x128xf32> -> vector<8x128xf32>
    %c0_3 = arith.constant 0 : index
    %c0_4 = arith.constant 0 : index
    %3 = vector.load %arg3[%c0_3, %c0_4] : memref<1x128xf32, #tpu.memory_space<vmem>>, vector<1x128xf32>
    %4 = vector.broadcast %3 : vector<1x128xf32> to vector<8x128xf32>
    %5 = arith.addf %2, %4 : vector<8x128xf32>
    %cst_5 = arith.constant 5.000000e-01 : f32
    %6 = vector.broadcast %cst_5 : f32 to vector<8x128xf32>
    %7 = arith.mulf %6, %5 : vector<8x128xf32>
    %cst_6 = arith.constant 0.707106769 : f32
    %8 = vector.broadcast %cst_6 : f32 to vector<8x128xf32>
    %9 = arith.mulf %5, %8 : vector<8x128xf32>
    %10 = math.erf %9 : vector<8x128xf32>
    %cst_7 = arith.constant 1.000000e+00 : f32
    %11 = vector.broadcast %cst_7 : f32 to vector<8x128xf32>
    %12 = arith.addf %11, %10 : vector<8x128xf32>
    %13 = arith.mulf %7, %12 : vector<8x128xf32>
    %c0_8 = arith.constant 0 : index
    %c0_9 = arith.constant 0 : index
    %14 = vector.load %arg4[%c0_8, %c0_9] : memref<128x128xf32, #tpu.memory_space<vmem>>, vector<128x128xf32>
    %cst_10 = arith.constant dense<0.000000e+00> : vector<8x128xf32>
    %15 = tpu.matmul %13, %14, %cst_10 {dimension_numbers = #tpu.dot_dimension_numbers<[1], [0], [0], [1], [0, 0, 1, 1], [], []>} : vector<8x128xf32>, vector<128x128xf32>, vector<8x128xf32> -> vector<8x128xf32>
    %c0_11 = arith.constant 0 : index
    %c0_12 = arith.constant 0 : index
    %16 = vector.load %arg5[%c0_11, %c0_12] : memref<1x128xf32, #tpu.memory_space<vmem>>, vector<1x128xf32>
    %17 = vector.broadcast %16 : vector<1x128xf32> to vector<8x128xf32>
    %18 = arith.addf %15, %17 : vector<8x128xf32>
    %cst_13 = arith.constant 5.000000e-01 : f32
    %19 = vector.broadcast %cst_13 : f32 to vector<8x128xf32>
    %20 = arith.mulf %19, %18 : vector<8x128xf32>
    %cst_14 = arith.constant 0.707106769 : f32
    %21 = vector.broadcast %cst_14 : f32 to vector<8x128xf32>
    %22 = arith.mulf %18, %21 : vector<8x128xf32>
    %23 = math.erf %22 : vector<8x128xf32>
    %cst_15 = arith.constant 1.000000e+00 : f32
    %24 = vector.broadcast %cst_15 : f32 to vector<8x128xf32>
    %25 = arith.addf %24, %23 : vector<8x128xf32>
    %26 = arith.mulf %20, %25 : vector<8x128xf32>
    %c0_16 = arith.constant 0 : index
    %c0_17 = arith.constant 0 : index
    %27 = vector.load %arg6[%c0_16, %c0_17] : memref<128x128xf32, #tpu.memory_space<vmem>>, vector<128x128xf32>
    %cst_18 = arith.constant dense<0.000000e+00> : vector<8x128xf32>
    %28 = tpu.matmul %26, %27, %cst_18 {dimension_numbers = #tpu.dot_dimension_numbers<[1], [0], [0], [1], [0, 0, 1, 1], [], []>} : vector<8x128xf32>, vector<128x128xf32>, vector<8x128xf32> -> vector<8x128xf32>
    %c0_19 = arith.constant 0 : index
    %c0_20 = arith.constant 0 : index
    %29 = vector.load %arg7[%c0_19, %c0_20] : memref<1x128xf32, #tpu.memory_space<vmem>>, vector<1x128xf32>
    %30 = vector.broadcast %29 : vector<1x128xf32> to vector<8x128xf32>
    %31 = arith.addf %28, %30 : vector<8x128xf32>
    %c0_21 = arith.constant 0 : index
    %c0_22 = arith.constant 0 : index
    %32 = vector.load %arg8[%c0_21, %c0_22] : memref<8x128xf32, #tpu.memory_space<vmem>>, vector<8x128xf32>
    tpu.vector_store %arg8[%c0_21, %c0_22], %31 {strides = array<i32>} : memref<8x128xf32, #tpu.memory_space<vmem>>, vector<8x128xf32>,
    return
  }
  func.func @transform_0(%arg0: i32) -> (i32, i32) {
    %c0_i32 = arith.constant 0 : i32
    %c0_i32_0 = arith.constant 0 : i32
    return %arg0, %c0_i32 : i32, i32
  }
  func.func @transform_1(%arg0: i32) -> (i32, i32) {
    %c0_i32 = arith.constant 0 : i32
    %c0_i32_0 = arith.constant 0 : i32
    %c0_i32_1 = arith.constant 0 : i32
    return %c0_i32, %c0_i32_0 : i32, i32
  }
  func.func @transform_2(%arg0: i32) -> (i32, i32) {
    %c0_i32 = arith.constant 0 : i32
    %c0_i32_0 = arith.constant 0 : i32
    %c0_i32_1 = arith.constant 0 : i32
    return %c0_i32, %c0_i32_0 : i32, i32
  }
  func.func @transform_3(%arg0: i32) -> (i32, i32) {
    %c0_i32 = arith.constant 0 : i32
    %c0_i32_0 = arith.constant 0 : i32
    %c0_i32_1 = arith.constant 0 : i32
    return %c0_i32, %c0_i32_0 : i32, i32
  }
  func.func @transform_4(%arg0: i32) -> (i32, i32) {
    %c0_i32 = arith.constant 0 : i32
    %c0_i32_0 = arith.constant 0 : i32
    %c0_i32_1 = arith.constant 0 : i32
    return %c0_i32, %c0_i32_0 : i32, i32
  }
  func.func @transform_5(%arg0: i32) -> (i32, i32) {
    %c0_i32 = arith.constant 0 : i32
    %c0_i32_0 = arith.constant 0 : i32
    %c0_i32_1 = arith.constant 0 : i32
    return %c0_i32, %c0_i32_0 : i32, i32
  }
  func.func @transform_6(%arg0: i32) -> (i32, i32) {
    %c0_i32 = arith.constant 0 : i32
    %c0_i32_0 = arith.constant 0 : i32
    %c0_i32_1 = arith.constant 0 : i32
    return %c0_i32, %c0_i32_0 : i32, i32
  }
  func.func @transform_7(%arg0: i32) -> (i32, i32) {
    %c0_i32 = arith.constant 0 : i32
    %c0_i32_0 = arith.constant 0 : i32
    return %arg0, %c0_i32 : i32, i32
  }
}

</mosaic_0001>

<llo_original>
// kernel: tpu_custom_call.1
$region0: #{tpu_custom_call.1}
  #allocation0 [shape = 'u32[]', space=smem, size = 0x4, offset = 0x4, fixed_abs, tag = 'smem constant byte address 0x4 - core index']
  #allocation1 [shape = 'u32[144,128]{1,0:T(1,128)}', space=vmem, size = 0x12000, scoped, tag = 'internal scratch']
  %s0 = inlined_call_operand.hbm [shape: f32[8,1024], index: 0, kind: input, shape index: {}]
  %s1 = inlined_call_operand.hbm [shape: f32[1024,128], index: 1, kind: input, shape index: {}]
  %s2 = inlined_call_operand.vmem [shape: f32[1,128], index: 2, kind: input, shape index: {}]
  %s3 = inlined_call_operand.hbm [shape: f32[128,128], index: 3, kind: input, shape index: {}]
  %s4 = inlined_call_operand.vmem [shape: f32[1,128], index: 4, kind: input, shape index: {}]
  %s5 = inlined_call_operand.hbm [shape: f32[128,128], index: 5, kind: input, shape index: {}]
  %s6 = inlined_call_operand.vmem [shape: f32[1,128], index: 6, kind: input, shape index: {}]
  %s7 = inlined_call_operand.hbm [shape: f32[8,128], index: 7, kind: output, shape index: {}]
  %s8 = sld [smem:[#allocation0]]
  $region54: #{tpu_custom_call.1} parent=0
    _
  %s10 = ssub.s32 1, %s8
  %s11 = scalar_select 0, %s10, %s8
  $region1: #{tpu_custom_call.1} parent=0
    #allocation2 [shape = 'u8[32768]{0}', space=vmem, size = 0x8000, scoped, tag = 'input window, operand 0, single buffered']
    #allocation3 [shape = 's32[1]{0}', space=sflag, size = 0x4, scoped, tag = 'scoped memory for tpu_custom_call.1']
    #allocation4 [shape = 's32[1]{0}', space=sflag, size = 0x4, scoped, tag = 'scoped memory for tpu_custom_call.1']
    #allocation5 [shape = 'u8[524288]{0}', space=vmem, size = 0x80000, scoped, tag = 'input window, operand 1, single buffered']
    #allocation6 [shape = 's32[1]{0}', space=sflag, size = 0x4, scoped, tag = 'scoped memory for tpu_custom_call.1']
    #allocation7 [shape = 'u8[65536]{0}', space=vmem, size = 0x10000, scoped, tag = 'input window, operand 3, single buffered']
    #allocation8 [shape = 'u8[65536]{0}', space=vmem, size = 0x10000, scoped, tag = 'input window, operand 5, single buffered']
    #allocation9 [shape = 's32[1]{0}', space=sflag, size = 0x4, scoped, tag = 'scoped memory for tpu_custom_call.1']
    #allocation10 [shape = 'u8[4096]{0}', space=vmem, size = 0x1000, scoped, tag = 'output window, operand 0, single buffered']
    %12 = vsyncpa [#allocation3], 0
    %13 = vsyncpa [#allocation6], 0
    %14 = vsyncpa [#allocation9], 0
    %15 = vsyncpa [#allocation4], 0
    // Predicated region
    $region2: #{tpu_custom_call.1} parent=1 // pred_check
      _
    $region3: #{tpu_custom_call.1} parent=1 // pred_check_branch
      %17 = sbr.rel (0) target = $region5
    $region4: #{tpu_custom_call.1} parent=1 // pred_region
      %s19 = ssub.s32 1024, 1024
      %20 = vsyncadd [#allocation3], %s19
      %s22 = sshll.u32 [#allocation2], 4
      %s23 = int_to_ptr.vmem [resolvable:$true] %s22
      %25 = dma.hbm_to_vmem [thread:$0]  %s0, 1024, %s23, [#allocation3]
    $region5: #{tpu_custom_call.1} parent=1 // pred_fallthru
      _
    // Predicated region
    $region6: #{tpu_custom_call.1} parent=1 // pred_check
      _
    $region7: #{tpu_custom_call.1} parent=1 // pred_check_branch
      %27 = sbr.rel (0) target = $region9
    $region8: #{tpu_custom_call.1} parent=1 // pred_region
      %s29 = ssub.s32 16384, 16384
      %30 = vsyncadd [#allocation6], %s29
      %s31 = sshll.u32 [#allocation5], 4
      %s32 = int_to_ptr.vmem [resolvable:$true] %s31
      %37 = dma.hbm_to_vmem [thread:$0]  %s1, 16384, %s32, [#allocation6], 128, 128, 8
    $region9: #{tpu_custom_call.1} parent=1 // pred_fallthru
      _
    // Predicated region
    $region10: #{tpu_custom_call.1} parent=1 // pred_check
      _
    $region11: #{tpu_custom_call.1} parent=1 // pred_check_branch
      %39 = sbr.rel (0) target = $region13
    $region12: #{tpu_custom_call.1} parent=1 // pred_region
      _
    $region13: #{tpu_custom_call.1} parent=1 // pred_fallthru
      _
    // Predicated region
    $region14: #{tpu_custom_call.1} parent=1 // pred_check
      _
    $region15: #{tpu_custom_call.1} parent=1 // pred_check_branch
      %41 = sbr.rel (0) target = $region17
    $region16: #{tpu_custom_call.1} parent=1 // pred_region
      %s43 = ssub.s32 2048, 2048
      %44 = vsyncadd [#allocation6], %s43
      %s45 = sshll.u32 [#allocation7], 4
      %s46 = int_to_ptr.vmem [resolvable:$true] %s45
      %51 = dma.hbm_to_vmem [thread:$0]  %s3, 2048, %s46, [#allocation6], 128, 128, 8
    $region17: #{tpu_custom_call.1} parent=1 // pred_fallthru
      _
    // Predicated region
    $region18: #{tpu_custom_call.1} parent=1 // pred_check
      _
    $region19: #{tpu_custom_call.1} parent=1 // pred_check_branch
      %53 = sbr.rel (0) target = $region21
    $region20: #{tpu_custom_call.1} parent=1 // pred_region
      _
    $region21: #{tpu_custom_call.1} parent=1 // pred_fallthru
      _
    // Predicated region
    $region22: #{tpu_custom_call.1} parent=1 // pred_check
      _
    $region23: #{tpu_custom_call.1} parent=1 // pred_check_branch
      %55 = sbr.rel (0) target = $region25
    $region24: #{tpu_custom_call.1} parent=1 // pred_region
      %s57 = ssub.s32 2048, 2048
      %58 = vsyncadd [#allocation9], %s57
      %s59 = sshll.u32 [#allocation8], 4
      %s60 = int_to_ptr.vmem [resolvable:$true] %s59
      %65 = dma.hbm_to_vmem [thread:$0]  %s5, 2048, %s60, [#allocation9], 128, 128, 8
    $region25: #{tpu_custom_call.1} parent=1 // pred_fallthru
      _
    // Predicated region
    $region26: #{tpu_custom_call.1} parent=1 // pred_check
      _
    $region27: #{tpu_custom_call.1} parent=1 // pred_check_branch
      %67 = sbr.rel (0) target = $region29
    $region28: #{tpu_custom_call.1} parent=1 // pred_region
      _
    $region29: #{tpu_custom_call.1} parent=1 // pred_fallthru
      _
    // Predicated region
    $region30: #{tpu_custom_call.1} parent=1 // pred_check
      _
    $region31: #{tpu_custom_call.1} parent=1 // pred_check_branch
      %69 = sbr.rel (0) target = $region33
    $region32: #{tpu_custom_call.1} parent=1 // pred_region
      %70 = dma.done [#allocation3], 1024
    $region33: #{tpu_custom_call.1} parent=1 // pred_fallthru
      _
    // Predicated region
    $region34: #{tpu_custom_call.1} parent=1 // pred_check
      _
    $region35: #{tpu_custom_call.1} parent=1 // pred_check_branch
      %72 = sbr.rel (0) target = $region37
    $region36: #{tpu_custom_call.1} parent=1 // pred_region
      %73 = dma.done [#allocation6], 16384
    $region37: #{tpu_custom_call.1} parent=1 // pred_fallthru
      _
    // Predicated region
    $region38: #{tpu_custom_call.1} parent=1 // pred_check
      _
    $region39: #{tpu_custom_call.1} parent=1 // pred_check_branch
      %75 = sbr.rel (0) target = $region41
    $region40: #{tpu_custom_call.1} parent=1 // pred_region
      %76 = dma.done [#allocation6], 2048
    $region41: #{tpu_custom_call.1} parent=1 // pred_fallthru
      _
    // Predicated region
    $region42: #{tpu_custom_call.1} parent=1 // pred_check
      _
    $region43: #{tpu_custom_call.1} parent=1 // pred_check_branch
      %78 = sbr.rel (0) target = $region45
    $region44: #{tpu_custom_call.1} parent=1 // pred_region
      %79 = dma.done [#allocation9], 2048
    $region45: #{tpu_custom_call.1} parent=1 // pred_fallthru
      _
    %v80 = vld [vmem:[#allocation2] sm:$0xff]
    %v81 = vld [vmem:[#allocation2 + $0x8] sm:$0xff]
    %v82 = vld [vmem:[#allocation2 + $0x10] sm:$0xff]
    %v83 = vld [vmem:[#allocation2 + $0x18] sm:$0xff]
    %v84 = vld [vmem:[#allocation2 + $0x20] sm:$0xff]
    %v85 = vld [vmem:[#allocation2 + $0x28] sm:$0xff]
    %v86 = vld [vmem:[#allocation2 + $0x30] sm:$0xff]
    %v87 = vld [vmem:[#allocation2 + $0x38] sm:$0xff]
    %v88 = vld [vmem:[#allocation5] sm:$0xff]
    %v89 = vld [vmem:[#allocation5 + $0x8] sm:$0xff]
    %v90 = vld [vmem:[#allocation5 + $0x10] sm:$0xff]
    %v91 = vld [vmem:[#allocation5 + $0x18] sm:$0xff]
    %v92 = vld [vmem:[#allocation5 + $0x20] sm:$0xff]
    %v93 = vld [vmem:[#allocation5 + $0x28] sm:$0xff]
    %v94 = vld [vmem:[#allocation5 + $0x30] sm:$0xff]
    %v95 = vld [vmem:[#allocation5 + $0x38] sm:$0xff]
    %v96 = vld [vmem:[#allocation5 + $0x40] sm:$0xff]
    %v97 = vld [vmem:[#allocation5 + $0x48] sm:$0xff]
    %v98 = vld [vmem:[#allocation5 + $0x50] sm:$0xff]
    %v99 = vld [vmem:[#allocation5 + $0x58] sm:$0xff]
    %v100 = vld [vmem:[#allocation5 + $0x60] sm:$0xff]
    %v101 = vld [vmem:[#allocation5 + $0x68] sm:$0xff]
    %v102 = vld [vmem:[#allocation5 + $0x70] sm:$0xff]
    %v103 = vld [vmem:[#allocation5 + $0x78] sm:$0xff]
    %v104 = vld [vmem:[#allocation5 + $0x80] sm:$0xff]
    %v105 = vld [vmem:[#allocation5 + $0x88] sm:$0xff]
    %v106 = vld [vmem:[#allocation5 + $0x90] sm:$0xff]
    %v107 = vld [vmem:[#allocation5 + $0x98] sm:$0xff]
    %v108 = vld [vmem:[#allocation5 + $0xa0] sm:$0xff]
    %v109 = vld [vmem:[#allocation5 + $0xa8] sm:$0xff]
    %v110 = vld [vmem:[#allocation5 + $0xb0] sm:$0xff]
    %v111 = vld [vmem:[#allocation5 + $0xb8] sm:$0xff]
    %v112 = vld [vmem:[#allocation5 + $0xc0] sm:$0xff]
    %v113 = vld [vmem:[#allocation5 + $0xc8] sm:$0xff]
    %v114 = vld [vmem:[#allocation5 + $0xd0] sm:$0xff]
    %v115 = vld [vmem:[#allocation5 + $0xd8] sm:$0xff]
    %v116 = vld [vmem:[#allocation5 + $0xe0] sm:$0xff]
    %v117 = vld [vmem:[#allocation5 + $0xe8] sm:$0xff]
    %v118 = vld [vmem:[#allocation5 + $0xf0] sm:$0xff]
    %v119 = vld [vmem:[#allocation5 + $0xf8] sm:$0xff]
    %v120 = vld [vmem:[#allocation5 + $0x100] sm:$0xff]
    %v121 = vld [vmem:[#allocation5 + $0x108] sm:$0xff]
    %v122 = vld [vmem:[#allocation5 + $0x110] sm:$0xff]
    %v123 = vld [vmem:[#allocation5 + $0x118] sm:$0xff]
    %v124 = vld [vmem:[#allocation5 + $0x120] sm:$0xff]
    %v125 = vld [vmem:[#allocation5 + $0x128] sm:$0xff]
    %v126 = vld [vmem:[#allocation5 + $0x130] sm:$0xff]
    %v127 = vld [vmem:[#allocation5 + $0x138] sm:$0xff]
    %v128 = vld [vmem:[#allocation5 + $0x140] sm:$0xff]
    %v129 = vld [vmem:[#allocation5 + $0x148] sm:$0xff]
    %v130 = vld [vmem:[#allocation5 + $0x150] sm:$0xff]
    %v131 = vld [vmem:[#allocation5 + $0x158] sm:$0xff]
    %v132 = vld [vmem:[#allocation5 + $0x160] sm:$0xff]
    %v133 = vld [vmem:[#allocation5 + $0x168] sm:$0xff]
    %v134 = vld [vmem:[#allocation5 + $0x170] sm:$0xff]
    %v135 = vld [vmem:[#allocation5 + $0x178] sm:$0xff]
    %v136 = vld [vmem:[#allocation5 + $0x180] sm:$0xff]
    %v137 = vld [vmem:[#allocation5 + $0x188] sm:$0xff]
    %v138 = vld [vmem:[#allocation5 + $0x190] sm:$0xff]
    %v139 = vld [vmem:[#allocation5 + $0x198] sm:$0xff]
    %v140 = vld [vmem:[#allocation5 + $0x1a0] sm:$0xff]
    %v141 = vld [vmem:[#allocation5 + $0x1a8] sm:$0xff]
    %v142 = vld [vmem:[#allocation5 + $0x1b0] sm:$0xff]
    %v143 = vld [vmem:[#allocation5 + $0x1b8] sm:$0xff]
    %v144 = vld [vmem:[#allocation5 + $0x1c0] sm:$0xff]
    %v145 = vld [vmem:[#allocation5 + $0x1c8] sm:$0xff]
    %v146 = vld [vmem:[#allocation5 + $0x1d0] sm:$0xff]
    %v147 = vld [vmem:[#allocation5 + $0x1d8] sm:$0xff]
    %v148 = vld [vmem:[#allocation5 + $0x1e0] sm:$0xff]
    %v149 = vld [vmem:[#allocation5 + $0x1e8] sm:$0xff]
    %v150 = vld [vmem:[#allocation5 + $0x1f0] sm:$0xff]
    %v151 = vld [vmem:[#allocation5 + $0x1f8] sm:$0xff]
    %v152 = vld [vmem:[#allocation5 + $0x200] sm:$0xff]
    %v153 = vld [vmem:[#allocation5 + $0x208] sm:$0xff]
    %v154 = vld [vmem:[#allocation5 + $0x210] sm:$0xff]
    %v155 = vld [vmem:[#allocation5 + $0x218] sm:$0xff]
    %v156 = vld [vmem:[#allocation5 + $0x220] sm:$0xff]
    %v157 = vld [vmem:[#allocation5 + $0x228] sm:$0xff]
    %v158 = vld [vmem:[#allocation5 + $0x230] sm:$0xff]
    %v159 = vld [vmem:[#allocation5 + $0x238] sm:$0xff]
    %v160 = vld [vmem:[#allocation5 + $0x240] sm:$0xff]
    %v161 = vld [vmem:[#allocation5 + $0x248] sm:$0xff]
    %v162 = vld [vmem:[#allocation5 + $0x250] sm:$0xff]
    %v163 = vld [vmem:[#allocation5 + $0x258] sm:$0xff]
    %v164 = vld [vmem:[#allocation5 + $0x260] sm:$0xff]
    %v165 = vld [vmem:[#allocation5 + $0x268] sm:$0xff]
    %v166 = vld [vmem:[#allocation5 + $0x270] sm:$0xff]
    %v167 = vld [vmem:[#allocation5 + $0x278] sm:$0xff]
    %v168 = vld [vmem:[#allocation5 + $0x280] sm:$0xff]
    %v169 = vld [vmem:[#allocation5 + $0x288] sm:$0xff]
    %v170 = vld [vmem:[#allocation5 + $0x290] sm:$0xff]
    %v171 = vld [vmem:[#allocation5 + $0x298] sm:$0xff]
    %v172 = vld [vmem:[#allocation5 + $0x2a0] sm:$0xff]
    %v173 = vld [vmem:[#allocation5 + $0x2a8] sm:$0xff]
    %v174 = vld [vmem:[#allocation5 + $0x2b0] sm:$0xff]
    %v175 = vld [vmem:[#allocation5 + $0x2b8] sm:$0xff]
    %v176 = vld [vmem:[#allocation5 + $0x2c0] sm:$0xff]
    %v177 = vld [vmem:[#allocation5 + $0x2c8] sm:$0xff]
    %v178 = vld [vmem:[#allocation5 + $0x2d0] sm:$0xff]
    %v179 = vld [vmem:[#allocation5 + $0x2d8] sm:$0xff]
    %v180 = vld [vmem:[#allocation5 + $0x2e0] sm:$0xff]
    %v181 = vld [vmem:[#allocation5 + $0x2e8] sm:$0xff]
    %v182 = vld [vmem:[#allocation5 + $0x2f0] sm:$0xff]
    %v183 = vld [vmem:[#allocation5 + $0x2f8] sm:$0xff]
    %v184 = vld [vmem:[#allocation5 + $0x300] sm:$0xff]
    %v185 = vld [vmem:[#allocation5 + $0x308] sm:$0xff]
    %v186 = vld [vmem:[#allocation5 + $0x310] sm:$0xff]
    %v187 = vld [vmem:[#allocation5 + $0x318] sm:$0xff]
    %v188 = vld [vmem:[#allocation5 + $0x320] sm:$0xff]
    %v189 = vld [vmem:[#allocation5 + $0x328] sm:$0xff]
    %v190 = vld [vmem:[#allocation5 + $0x330] sm:$0xff]
    %v191 = vld [vmem:[#allocation5 + $0x338] sm:$0xff]
    %v192 = vld [vmem:[#allocation5 + $0x340] sm:$0xff]
    %v193 = vld [vmem:[#allocation5 + $0x348] sm:$0xff]
    %v194 = vld [vmem:[#allocation5 + $0x350] sm:$0xff]
    %v195 = vld [vmem:[#allocation5 + $0x358] sm:$0xff]
    %v196 = vld [vmem:[#allocation5 + $0x360] sm:$0xff]
    %v197 = vld [vmem:[#allocation5 + $0x368] sm:$0xff]
    %v198 = vld [vmem:[#allocation5 + $0x370] sm:$0xff]
    %v199 = vld [vmem:[#allocation5 + $0x378] sm:$0xff]
    %v200 = vld [vmem:[#allocation5 + $0x380] sm:$0xff]
    %v201 = vld [vmem:[#allocation5 + $0x388] sm:$0xff]
    %v202 = vld [vmem:[#allocation5 + $0x390] sm:$0xff]
    %v203 = vld [vmem:[#allocation5 + $0x398] sm:$0xff]
    %v204 = vld [vmem:[#allocation5 + $0x3a0] sm:$0xff]
    %v205 = vld [vmem:[#allocation5 + $0x3a8] sm:$0xff]
    %v206 = vld [vmem:[#allocation5 + $0x3b0] sm:$0xff]
    %v207 = vld [vmem:[#allocation5 + $0x3b8] sm:$0xff]
    %v208 = vld [vmem:[#allocation5 + $0x3c0] sm:$0xff]
    %v209 = vld [vmem:[#allocation5 + $0x3c8] sm:$0xff]
    %v210 = vld [vmem:[#allocation5 + $0x3d0] sm:$0xff]
    %v211 = vld [vmem:[#allocation5 + $0x3d8] sm:$0xff]
    %v212 = vld [vmem:[#allocation5 + $0x3e0] sm:$0xff]
    %v213 = vld [vmem:[#allocation5 + $0x3e8] sm:$0xff]
    %v214 = vld [vmem:[#allocation5 + $0x3f0] sm:$0xff]
    %v215 = vld [vmem:[#allocation5 + $0x3f8] sm:$0xff]
    %v216 = vld [vmem:[%s2] sm:$0x1]
    %v218 = vlaneseq
    %v219 = vshrl.u32 %v218, 7
    %v220 = vsub.s32 0, %v219
    %v221 = vrot.slane %v216, %v220
    %223 = vmatprep.subr.mxu0 0.0
    %224 = vmatpush1.msra.mxu0 %v103
    %225 = vmatprep.subr.mxu0 0.0
    %226 = vmatpush1.msra.mxu0 %v102
    %227 = vmatprep.subr.mxu0 0.0
    %228 = vmatpush1.msra.mxu0 %v101
    %229 = vmatprep.subr.mxu0 0.0
    %230 = vmatpush1.msra.mxu0 %v100
    %231 = vmatprep.subr.mxu0 0.0
    %232 = vmatpush1.msra.mxu0 %v99
    %233 = vmatprep.subr.mxu0 0.0
    %234 = vmatpush1.msra.mxu0 %v98
    %235 = vmatprep.subr.mxu0 0.0
    %236 = vmatpush1.msra.mxu0 %v97
    %237 = vmatprep.subr.mxu0 0.0
    %238 = vmatpush1.msra.mxu0 %v96
    %239 = vmatprep.subr.mxu0 0.0
    %240 = vmatpush1.msra.mxu0 %v95
    %241 = vmatprep.subr.mxu0 0.0
    %242 = vmatpush1.msra.mxu0 %v94
    %243 = vmatprep.subr.mxu0 0.0
    %244 = vmatpush1.msra.mxu0 %v93
    %245 = vmatprep.subr.mxu0 0.0
    %246 = vmatpush1.msra.mxu0 %v92
    %247 = vmatprep.subr.mxu0 0.0
    %248 = vmatpush1.msra.mxu0 %v91
    %249 = vmatprep.subr.mxu0 0.0
    %250 = vmatpush1.msra.mxu0 %v90
    %251 = vmatprep.subr.mxu0 0.0
    %252 = vmatpush1.msra.mxu0 %v89
    %253 = vmatprep.subr.mxu0 0.0
    %254 = vmatpush1.msra.mxu0 %v88
    %255 = vmatprep.subr.mxu0 0.0
    %256 = vmatpush2.msra.mxu0 %v119
    %257 = vmatprep.subr.mxu0 0.0
    %258 = vmatpush2.msra.mxu0 %v118
    %259 = vmatprep.subr.mxu0 0.0
    %260 = vmatpush2.msra.mxu0 %v117
    %261 = vmatprep.subr.mxu0 0.0
    %262 = vmatpush2.msra.mxu0 %v116
    %263 = vmatprep.subr.mxu0 0.0
    %264 = vmatpush2.msra.mxu0 %v115
    %265 = vmatprep.subr.mxu0 0.0
    %266 = vmatpush2.msra.mxu0 %v114
    %267 = vmatprep.subr.mxu0 0.0
    %268 = vmatpush2.msra.mxu0 %v113
    %269 = vmatprep.subr.mxu0 0.0
    %270 = vmatpush2.msra.mxu0 %v112
    %271 = vmatprep.subr.mxu0 0.0
    %272 = vmatpush2.msra.mxu0 %v111
    %273 = vmatprep.subr.mxu0 0.0
    %274 = vmatpush2.msra.mxu0 %v110
    %275 = vmatprep.subr.mxu0 0.0
    %276 = vmatpush2.msra.mxu0 %v109
    %277 = vmatprep.subr.mxu0 0.0
    %278 = vmatpush2.msra.mxu0 %v108
    %279 = vmatprep.subr.mxu0 0.0
    %280 = vmatpush2.msra.mxu0 %v107
    %281 = vmatprep.subr.mxu0 0.0
    %282 = vmatpush2.msra.mxu0 %v106
    %283 = vmatprep.subr.mxu0 0.0
    %284 = vmatpush2.msra.mxu0 %v105
    %285 = vmatprep.subr.mxu0 0.0
    %286 = vmatpush2.msra.mxu0 %v104
    %287 = vmatprep.mubr.f32.mxu0 %v81
    %288 = vmatmul.mubr.f32.gmra.mxu0 %v80
    %v289 = vpop.f32.mrf.mxu0
    %v290 = vadd.f32 %v221, %v289
    %v291 = vpop.f32.mrf.mxu0
    %292 = vdwg.mxu0
    %293 = vmatprep.subr.mxu0 0.0
    %294 = vmatpush1.msra.mxu0 %v135
    %295 = vmatprep.subr.mxu0 0.0
    %296 = vmatpush1.msra.mxu0 %v134
    %297 = vmatprep.subr.mxu0 0.0
    %298 = vmatpush1.msra.mxu0 %v133
    %299 = vmatprep.subr.mxu0 0.0
    %300 = vmatpush1.msra.mxu0 %v132
    %301 = vmatprep.subr.mxu0 0.0
    %302 = vmatpush1.msra.mxu0 %v131
    %303 = vmatprep.subr.mxu0 0.0
    %304 = vmatpush1.msra.mxu0 %v130
    %305 = vmatprep.subr.mxu0 0.0
    %306 = vmatpush1.msra.mxu0 %v129
    %307 = vmatprep.subr.mxu0 0.0
    %308 = vmatpush1.msra.mxu0 %v128
    %309 = vmatprep.subr.mxu0 0.0
    %310 = vmatpush1.msra.mxu0 %v127
    %311 = vmatprep.subr.mxu0 0.0
    %312 = vmatpush1.msra.mxu0 %v126
    %313 = vmatprep.subr.mxu0 0.0
    %314 = vmatpush1.msra.mxu0 %v125
    %315 = vmatprep.subr.mxu0 0.0
    %316 = vmatpush1.msra.mxu0 %v124
    %317 = vmatprep.subr.mxu0 0.0
    %318 = vmatpush1.msra.mxu0 %v123
    %319 = vmatprep.subr.mxu0 0.0
    %320 = vmatpush1.msra.mxu0 %v122
    %321 = vmatprep.subr.mxu0 0.0
    %322 = vmatpush1.msra.mxu0 %v121
    %323 = vmatprep.subr.mxu0 0.0
    %324 = vmatpush1.msra.mxu0 %v120
    %325 = vmatprep.subr.mxu0 0.0
    %326 = vmatpush2.msra.mxu0 %v151
    %327 = vmatprep.subr.mxu0 0.0
    %328 = vmatpush2.msra.mxu0 %v150
    %329 = vmatprep.subr.mxu0 0.0
    %330 = vmatpush2.msra.mxu0 %v149
    %331 = vmatprep.subr.mxu0 0.0
    %332 = vmatpush2.msra.mxu0 %v148
    %333 = vmatprep.subr.mxu0 0.0
    %334 = vmatpush2.msra.mxu0 %v147
    %335 = vmatprep.subr.mxu0 0.0
    %336 = vmatpush2.msra.mxu0 %v146
    %337 = vmatprep.subr.mxu0 0.0
    %338 = vmatpush2.msra.mxu0 %v145
    %339 = vmatprep.subr.mxu0 0.0
    %340 = vmatpush2.msra.mxu0 %v144
    %341 = vmatprep.subr.mxu0 0.0
    %342 = vmatpush2.msra.mxu0 %v143
    %343 = vmatprep.subr.mxu0 0.0
    %344 = vmatpush2.msra.mxu0 %v142
    %345 = vmatprep.subr.mxu0 0.0
    %346 = vmatpush2.msra.mxu0 %v141
    %347 = vmatprep.subr.mxu0 0.0
    %348 = vmatpush2.msra.mxu0 %v140
    %349 = vmatprep.subr.mxu0 0.0
    %350 = vmatpush2.msra.mxu0 %v139
    %351 = vmatprep.subr.mxu0 0.0
    %352 = vmatpush2.msra.mxu0 %v138
    %353 = vmatprep.subr.mxu0 0.0
    %354 = vmatpush2.msra.mxu0 %v137
    %355 = vmatprep.subr.mxu0 0.0
    %356 = vmatpush2.msra.mxu0 %v136
    %357 = vmatprep.mubr.f32.mxu0 %v83
    %358 = vmatmul.mubr.f32.gmra.mxu0 %v82
    %v359 = vpop.f32.mrf.mxu0
    %v360 = vadd.f32 %v290, %v359
    %v361 = vpop.f32.mrf.mxu0
    %362 = vdwg.mxu0
    %363 = vmatprep.subr.mxu0 0.0
    %364 = vmatpush1.msra.mxu0 %v167
    %365 = vmatprep.subr.mxu0 0.0
    %366 = vmatpush1.msra.mxu0 %v166
    %367 = vmatprep.subr.mxu0 0.0
    %368 = vmatpush1.msra.mxu0 %v165
    %369 = vmatprep.subr.mxu0 0.0
    %370 = vmatpush1.msra.mxu0 %v164
    %371 = vmatprep.subr.mxu0 0.0
    %372 = vmatpush1.msra.mxu0 %v163
    %373 = vmatprep.subr.mxu0 0.0
    %374 = vmatpush1.msra.mxu0 %v162
    %375 = vmatprep.subr.mxu0 0.0
    %376 = vmatpush1.msra.mxu0 %v161
    %377 = vmatprep.subr.mxu0 0.0
    %378 = vmatpush1.msra.mxu0 %v160
    %379 = vmatprep.subr.mxu0 0.0
    %380 = vmatpush1.msra.mxu0 %v159
    %381 = vmatprep.subr.mxu0 0.0
    %382 = vmatpush1.msra.mxu0 %v158
    %383 = vmatprep.subr.mxu0 0.0
    %384 = vmatpush1.msra.mxu0 %v157
    %385 = vmatprep.subr.mxu0 0.0
    %386 = vmatpush1.msra.mxu0 %v156
    %387 = vmatprep.subr.mxu0 0.0
    %388 = vmatpush1.msra.mxu0 %v155
    %389 = vmatprep.subr.mxu0 0.0
    %390 = vmatpush1.msra.mxu0 %v154
    %391 = vmatprep.subr.mxu0 0.0
    %392 = vmatpush1.msra.mxu0 %v153
    %393 = vmatprep.subr.mxu0 0.0
    %394 = vmatpush1.msra.mxu0 %v152
    %395 = vmatprep.subr.mxu0 0.0
    %396 = vmatpush2.msra.mxu0 %v183
    %397 = vmatprep.subr.mxu0 0.0
    %398 = vmatpush2.msra.mxu0 %v182
    %399 = vmatprep.subr.mxu0 0.0
    %400 = vmatpush2.msra.mxu0 %v181
    %401 = vmatprep.subr.mxu0 0.0
    %402 = vmatpush2.msra.mxu0 %v180
    %403 = vmatprep.subr.mxu0 0.0
    %404 = vmatpush2.msra.mxu0 %v179
    %405 = vmatprep.subr.mxu0 0.0
    %406 = vmatpush2.msra.mxu0 %v178
    %407 = vmatprep.subr.mxu0 0.0
    %408 = vmatpush2.msra.mxu0 %v177
    %409 = vmatprep.subr.mxu0 0.0
    %410 = vmatpush2.msra.mxu0 %v176
    %411 = vmatprep.subr.mxu0 0.0
    %412 = vmatpush2.msra.mxu0 %v175
    %413 = vmatprep.subr.mxu0 0.0
    %414 = vmatpush2.msra.mxu0 %v174
    %415 = vmatprep.subr.mxu0 0.0
    %416 = vmatpush2.msra.mxu0 %v173
    %417 = vmatprep.subr.mxu0 0.0
    %418 = vmatpush2.msra.mxu0 %v172
    %419 = vmatprep.subr.mxu0 0.0
    %420 = vmatpush2.msra.mxu0 %v171
    %421 = vmatprep.subr.mxu0 0.0
    %422 = vmatpush2.msra.mxu0 %v170
    %423 = vmatprep.subr.mxu0 0.0
    %424 = vmatpush2.msra.mxu0 %v169
    %425 = vmatprep.subr.mxu0 0.0
    %426 = vmatpush2.msra.mxu0 %v168
    %427 = vmatprep.mubr.f32.mxu0 %v85
    %428 = vmatmul.mubr.f32.gmra.mxu0 %v84
    %v429 = vpop.f32.mrf.mxu0
    %v430 = vadd.f32 %v360, %v429
    %v431 = vpop.f32.mrf.mxu0
    %432 = vdwg.mxu0
    %433 = vmatprep.subr.mxu0 0.0
    %434 = vmatpush1.msra.mxu0 %v199
    %435 = vmatprep.subr.mxu0 0.0
    %436 = vmatpush1.msra.mxu0 %v198
    %437 = vmatprep.subr.mxu0 0.0
    %438 = vmatpush1.msra.mxu0 %v197
    %439 = vmatprep.subr.mxu0 0.0
    %440 = vmatpush1.msra.mxu0 %v196
    %441 = vmatprep.subr.mxu0 0.0
    %442 = vmatpush1.msra.mxu0 %v195
    %443 = vmatprep.subr.mxu0 0.0
    %444 = vmatpush1.msra.mxu0 %v194
    %445 = vmatprep.subr.mxu0 0.0
    %446 = vmatpush1.msra.mxu0 %v193
    %447 = vmatprep.subr.mxu0 0.0
    %448 = vmatpush1.msra.mxu0 %v192
    %449 = vmatprep.subr.mxu0 0.0
    %450 = vmatpush1.msra.mxu0 %v191
    %451 = vmatprep.subr.mxu0 0.0
    %452 = vmatpush1.msra.mxu0 %v190
    %453 = vmatprep.subr.mxu0 0.0
    %454 = vmatpush1.msra.mxu0 %v189
    %455 = vmatprep.subr.mxu0 0.0
    %456 = vmatpush1.msra.mxu0 %v188
    %457 = vmatprep.subr.mxu0 0.0
    %458 = vmatpush1.msra.mxu0 %v187
    %459 = vmatprep.subr.mxu0 0.0
    %460 = vmatpush1.msra.mxu0 %v186
    %461 = vmatprep.subr.mxu0 0.0
    %462 = vmatpush1.msra.mxu0 %v185
    %463 = vmatprep.subr.mxu0 0.0
    %464 = vmatpush1.msra.mxu0 %v184
    %465 = vmatprep.subr.mxu0 0.0
    %466 = vmatpush2.msra.mxu0 %v215
    %467 = vmatprep.subr.mxu0 0.0
    %468 = vmatpush2.msra.mxu0 %v214
    %469 = vmatprep.subr.mxu0 0.0
    %470 = vmatpush2.msra.mxu0 %v213
    %471 = vmatprep.subr.mxu0 0.0
    %472 = vmatpush2.msra.mxu0 %v212
    %473 = vmatprep.subr.mxu0 0.0
    %474 = vmatpush2.msra.mxu0 %v211
    %475 = vmatprep.subr.mxu0 0.0
    %476 = vmatpush2.msra.mxu0 %v210
    %477 = vmatprep.subr.mxu0 0.0
    %478 = vmatpush2.msra.mxu0 %v209
    %479 = vmatprep.subr.mxu0 0.0
    %480 = vmatpush2.msra.mxu0 %v208
    %481 = vmatprep.subr.mxu0 0.0
    %482 = vmatpush2.msra.mxu0 %v207
    %483 = vmatprep.subr.mxu0 0.0
    %484 = vmatpush2.msra.mxu0 %v206
    %485 = vmatprep.subr.mxu0 0.0
    %486 = vmatpush2.msra.mxu0 %v205
    %487 = vmatprep.subr.mxu0 0.0
    %488 = vmatpush2.msra.mxu0 %v204
    %489 = vmatprep.subr.mxu0 0.0
    %490 = vmatpush2.msra.mxu0 %v203
    %491 = vmatprep.subr.mxu0 0.0
    %492 = vmatpush2.msra.mxu0 %v202
    %493 = vmatprep.subr.mxu0 0.0
    %494 = vmatpush2.msra.mxu0 %v201
    %495 = vmatprep.subr.mxu0 0.0
    %496 = vmatpush2.msra.mxu0 %v200
    %497 = vmatprep.mubr.f32.mxu0 %v87
    %498 = vmatmul.mubr.f32.gmra.mxu0 %v86
    %v499 = vpop.f32.mrf.mxu0
    %v500 = vadd.f32 %v430, %v499
    %v501 = vpop.f32.mrf.mxu0
    %502 = vdwg.mxu0
    %v503 = vmul.f32 %v500, 0.5
    %v504 = vmul.f32 %v500, 0.70710677
    %v505 = verf.f32.pop %v504
    %v506 = vadd.f32 %v505, 1.0
    %v507 = vmul.f32 %v503, %v506
    %v508 = vld [vmem:[#allocation7] sm:$0xff]
    %v509 = vld [vmem:[#allocation7 + $0x8] sm:$0xff]
    %v510 = vld [vmem:[#allocation7 + $0x10] sm:$0xff]
    %v511 = vld [vmem:[#allocation7 + $0x18] sm:$0xff]
    %v512 = vld [vmem:[#allocation7 + $0x20] sm:$0xff]
    %v513 = vld [vmem:[#allocation7 + $0x28] sm:$0xff]
    %v514 = vld [vmem:[#allocation7 + $0x30] sm:$0xff]
    %v515 = vld [vmem:[#allocation7 + $0x38] sm:$0xff]
    %v516 = vld [vmem:[#allocation7 + $0x40] sm:$0xff]
    %v517 = vld [vmem:[#allocation7 + $0x48] sm:$0xff]
    %v518 = vld [vmem:[#allocation7 + $0x50] sm:$0xff]
    %v519 = vld [vmem:[#allocation7 + $0x58] sm:$0xff]
    %v520 = vld [vmem:[#allocation7 + $0x60] sm:$0xff]
    %v521 = vld [vmem:[#allocation7 + $0x68] sm:$0xff]
    %v522 = vld [vmem:[#allocation7 + $0x70] sm:$0xff]
    %v523 = vld [vmem:[#allocation7 + $0x78] sm:$0xff]
    %v524 = vld [vmem:[%s4] sm:$0x1]
    %v526 = vlaneseq
    %v527 = vshrl.u32 %v526, 7
    %v528 = vsub.s32 0, %v527
    %v529 = vrot.slane %v524, %v528
    %531 = vmatprep.subr.mxu0 0.0
    %532 = vmatpush1.msra.mxu0 %v523
    %533 = vmatprep.subr.mxu0 0.0
    %534 = vmatpush1.msra.mxu0 %v522
    %535 = vmatprep.subr.mxu0 0.0
    %536 = vmatpush1.msra.mxu0 %v521
    %537 = vmatprep.subr.mxu0 0.0
    %538 = vmatpush1.msra.mxu0 %v520
    %539 = vmatprep.subr.mxu0 0.0
    %540 = vmatpush1.msra.mxu0 %v519
    %541 = vmatprep.subr.mxu0 0.0
    %542 = vmatpush1.msra.mxu0 %v518
    %543 = vmatprep.subr.mxu0 0.0
    %544 = vmatpush1.msra.mxu0 %v517
    %545 = vmatprep.subr.mxu0 0.0
    %546 = vmatpush1.msra.mxu0 %v516
    %547 = vmatprep.subr.mxu0 0.0
    %548 = vmatpush1.msra.mxu0 %v515
    %549 = vmatprep.subr.mxu0 0.0
    %550 = vmatpush1.msra.mxu0 %v514
    %551 = vmatprep.subr.mxu0 0.0
    %552 = vmatpush1.msra.mxu0 %v513
    %553 = vmatprep.subr.mxu0 0.0
    %554 = vmatpush1.msra.mxu0 %v512
    %555 = vmatprep.subr.mxu0 0.0
    %556 = vmatpush1.msra.mxu0 %v511
    %557 = vmatprep.subr.mxu0 0.0
    %558 = vmatpush1.msra.mxu0 %v510
    %559 = vmatprep.subr.mxu0 0.0
    %560 = vmatpush1.msra.mxu0 %v509
    %561 = vmatprep.subr.mxu0 0.0
    %562 = vmatpush1.msra.mxu0 %v508
    %563 = vmatprep.subr.mxu0 0.0
    %564 = vmatpush2.msra.mxu0 0.0
    %565 = vmatprep.subr.mxu0 0.0
    %566 = vmatpush2.msra.mxu0 0.0
    %567 = vmatprep.subr.mxu0 0.0
    %568 = vmatpush2.msra.mxu0 0.0
    %569 = vmatprep.subr.mxu0 0.0
    %570 = vmatpush2.msra.mxu0 0.0
    %571 = vmatprep.subr.mxu0 0.0
    %572 = vmatpush2.msra.mxu0 0.0
    %573 = vmatprep.subr.mxu0 0.0
    %574 = vmatpush2.msra.mxu0 0.0
    %575 = vmatprep.subr.mxu0 0.0
    %576 = vmatpush2.msra.mxu0 0.0
    %577 = vmatprep.subr.mxu0 0.0
    %578 = vmatpush2.msra.mxu0 0.0
    %579 = vmatprep.subr.mxu0 0.0
    %580 = vmatpush2.msra.mxu0 0.0
    %581 = vmatprep.subr.mxu0 0.0
    %582 = vmatpush2.msra.mxu0 0.0
    %583 = vmatprep.subr.mxu0 0.0
    %584 = vmatpush2.msra.mxu0 0.0
    %585 = vmatprep.subr.mxu0 0.0
    %586 = vmatpush2.msra.mxu0 0.0
    %587 = vmatprep.subr.mxu0 0.0
    %588 = vmatpush2.msra.mxu0 0.0
    %589 = vmatprep.subr.mxu0 0.0
    %590 = vmatpush2.msra.mxu0 0.0
    %591 = vmatprep.subr.mxu0 0.0
    %592 = vmatpush2.msra.mxu0 0.0
    %593 = vmatprep.subr.mxu0 0.0
    %594 = vmatpush2.msra.mxu0 0.0
    %595 = vmatprep.mubr.f32.mxu0 0.0
    %596 = vmatmul.mubr.f32.gmra.mxu0 %v507
    %v597 = vpop.f32.mrf.mxu0
    %v598 = vadd.f32 %v529, %v597
    %v599 = vpop.f32.mrf.mxu0
    %600 = vdwg.mxu0
    %v601 = vmul.f32 %v598, 0.5
    %v602 = vmul.f32 %v598, 0.70710677
    %v603 = verf.f32.pop %v602
    %v604 = vadd.f32 %v603, 1.0
    %v605 = vmul.f32 %v601, %v604
    %v606 = vld [vmem:[#allocation8] sm:$0xff]
    %v607 = vld [vmem:[#allocation8 + $0x8] sm:$0xff]
    %v608 = vld [vmem:[#allocation8 + $0x10] sm:$0xff]
    %v609 = vld [vmem:[#allocation8 + $0x18] sm:$0xff]
    %v610 = vld [vmem:[#allocation8 + $0x20] sm:$0xff]
    %v611 = vld [vmem:[#allocation8 + $0x28] sm:$0xff]
    %v612 = vld [vmem:[#allocation8 + $0x30] sm:$0xff]
    %v613 = vld [vmem:[#allocation8 + $0x38] sm:$0xff]
    %v614 = vld [vmem:[#allocation8 + $0x40] sm:$0xff]
    %v615 = vld [vmem:[#allocation8 + $0x48] sm:$0xff]
    %v616 = vld [vmem:[#allocation8 + $0x50] sm:$0xff]
    %v617 = vld [vmem:[#allocation8 + $0x58] sm:$0xff]
    %v618 = vld [vmem:[#allocation8 + $0x60] sm:$0xff]
    %v619 = vld [vmem:[#allocation8 + $0x68] sm:$0xff]
    %v620 = vld [vmem:[#allocation8 + $0x70] sm:$0xff]
    %v621 = vld [vmem:[#allocation8 + $0x78] sm:$0xff]
    %v622 = vld [vmem:[%s6] sm:$0x1]
    %v624 = vlaneseq
    %v625 = vshrl.u32 %v624, 7
    %v626 = vsub.s32 0, %v625
    %v627 = vrot.slane %v622, %v626
    %629 = vmatprep.subr.mxu0 0.0
    %630 = vmatpush1.msra.mxu0 %v621
    %631 = vmatprep.subr.mxu0 0.0
    %632 = vmatpush1.msra.mxu0 %v620
    %633 = vmatprep.subr.mxu0 0.0
    %634 = vmatpush1.msra.mxu0 %v619
    %635 = vmatprep.subr.mxu0 0.0
    %636 = vmatpush1.msra.mxu0 %v618
    %637 = vmatprep.subr.mxu0 0.0
    %638 = vmatpush1.msra.mxu0 %v617
    %639 = vmatprep.subr.mxu0 0.0
    %640 = vmatpush1.msra.mxu0 %v616
    %641 = vmatprep.subr.mxu0 0.0
    %642 = vmatpush1.msra.mxu0 %v615
    %643 = vmatprep.subr.mxu0 0.0
    %644 = vmatpush1.msra.mxu0 %v614
    %645 = vmatprep.subr.mxu0 0.0
    %646 = vmatpush1.msra.mxu0 %v613
    %647 = vmatprep.subr.mxu0 0.0
    %648 = vmatpush1.msra.mxu0 %v612
    %649 = vmatprep.subr.mxu0 0.0
    %650 = vmatpush1.msra.mxu0 %v611
    %651 = vmatprep.subr.mxu0 0.0
    %652 = vmatpush1.msra.mxu0 %v610
    %653 = vmatprep.subr.mxu0 0.0
    %654 = vmatpush1.msra.mxu0 %v609
    %655 = vmatprep.subr.mxu0 0.0
    %656 = vmatpush1.msra.mxu0 %v608
    %657 = vmatprep.subr.mxu0 0.0
    %658 = vmatpush1.msra.mxu0 %v607
    %659 = vmatprep.subr.mxu0 0.0
    %660 = vmatpush1.msra.mxu0 %v606
    %661 = vmatprep.subr.mxu0 0.0
    %662 = vmatpush2.msra.mxu0 0.0
    %663 = vmatprep.subr.mxu0 0.0
    %664 = vmatpush2.msra.mxu0 0.0
    %665 = vmatprep.subr.mxu0 0.0
    %666 = vmatpush2.msra.mxu0 0.0
    %667 = vmatprep.subr.mxu0 0.0
    %668 = vmatpush2.msra.mxu0 0.0
    %669 = vmatprep.subr.mxu0 0.0
    %670 = vmatpush2.msra.mxu0 0.0
    %671 = vmatprep.subr.mxu0 0.0
    %672 = vmatpush2.msra.mxu0 0.0
    %673 = vmatprep.subr.mxu0 0.0
    %674 = vmatpush2.msra.mxu0 0.0
    %675 = vmatprep.subr.mxu0 0.0
    %676 = vmatpush2.msra.mxu0 0.0
    %677 = vmatprep.subr.mxu0 0.0
    %678 = vmatpush2.msra.mxu0 0.0
    %679 = vmatprep.subr.mxu0 0.0
    %680 = vmatpush2.msra.mxu0 0.0
    %681 = vmatprep.subr.mxu0 0.0
    %682 = vmatpush2.msra.mxu0 0.0
    %683 = vmatprep.subr.mxu0 0.0
    %684 = vmatpush2.msra.mxu0 0.0
    %685 = vmatprep.subr.mxu0 0.0
    %686 = vmatpush2.msra.mxu0 0.0
    %687 = vmatprep.subr.mxu0 0.0
    %688 = vmatpush2.msra.mxu0 0.0
    %689 = vmatprep.subr.mxu0 0.0
    %690 = vmatpush2.msra.mxu0 0.0
    %691 = vmatprep.subr.mxu0 0.0
    %692 = vmatpush2.msra.mxu0 0.0
    %693 = vmatprep.mubr.f32.mxu0 0.0
    %694 = vmatmul.mubr.f32.gmra.mxu0 %v605
    %v695 = vpop.f32.mrf.mxu0
    %v696 = vadd.f32 %v627, %v695
    %v697 = vpop.f32.mrf.mxu0
    %698 = vdwg.mxu0
    %699 = vst [vmem:[#allocation10] sm:$0xff] %v696
    // Predicated region
    $region46: #{tpu_custom_call.1} parent=1 // pred_check
      _
    $region47: #{tpu_custom_call.1} parent=1 // pred_check_branch
      %701 = sbr.rel (0) target = $region49
    $region48: #{tpu_custom_call.1} parent=1 // pred_region
      %s703 = ssub.s32 128, 128
      %704 = vsyncadd [#allocation4], %s703
      %s706 = sshll.u32 [#allocation10], 4
      %s707 = int_to_ptr.vmem [resolvable:$true] %s706
      %709 = dma.vmem_to_hbm [thread:$0]  %s707, 128, %s7, [#allocation4]
    $region49: #{tpu_custom_call.1} parent=1 // pred_fallthru
      _
    // Predicated region
    $region50: #{tpu_custom_call.1} parent=1 // pred_check
      _
    $region51: #{tpu_custom_call.1} parent=1 // pred_check_branch
      %711 = sbr.rel (0) target = $region53
    $region52: #{tpu_custom_call.1} parent=1 // pred_region
      %712 = dma.done [#allocation4], 128
    $region53: #{tpu_custom_call.1} parent=1 // pred_fallthru
      _
    %713 = vsyncpa [#allocation3], 1
    %714 = vsyncpa [#allocation6], 1
    %715 = vsyncpa [#allocation9], 1
    %716 = vsyncpa [#allocation4], 1

</llo_original>
